<compile_context>
chip_gen: v7x
topology: tpu7x:2x2x1
jax: 0.10.0
libtpu: 0.0.40
codegen_flags: <defaults>
</compile_context>

<pallas_src>
import functools

import jax
import jax.numpy as jnp
from jax import lax
from jax.experimental import pallas as pl
from jax.experimental.pallas import tpu as pltpu

HIDDEN = 50
DEFAULT_BATCH_TILE = 4096   # columns (batch elems) per grid step; multiple of 256
_SLAB = 256                 # inner slab width (lanes); bounds per-iteration vregs


def _round_up(n, m):
    return ((n + m - 1) // m) * m


def _default_bf16_epilogue():
    """bf16 bias+ReLU epilogue only on chips with a bf16 VPU (v6e / v7x)."""
    try:
        kind = jax.devices()[0].device_kind.lower()
    except Exception:  # pragma: no cover - no backend available
        return False
    return ("v6" in kind) or ("v7" in kind)


_BF16_EPILOGUE_DEFAULT = _default_bf16_epilogue()


def mlp_kernel(x_ref, w1_ref, b1_ref, w2_ref, b2_ref, w3_ref, b3_ref, o_ref,
               *, bf16_epilogue):
    """One batch tile.

    x_ref: [n_slabs, slab, obs] f32 (batch-major, native PyTorch layout)
    o_ref: [n_slabs, n_act, slab] f32 (feature-major -> lane-dense stores)
    Weights are bf16 [out, in]; biases f32 [out, 1]; all VMEM-resident.
    """
    n_slabs = x_ref.shape[0]
    act_dt = jnp.bfloat16 if bf16_epilogue else jnp.float32

    # Hoist weight / bias loads (and epilogue casts) out of the slab loop.
    w1 = w1_ref[...]                       # [H, obs] bf16
    w2 = w2_ref[...]                       # [H, H]   bf16
    w3 = w3_ref[...]                       # [n_act, H] bf16
    b1 = b1_ref[...].astype(act_dt)        # [H, 1]
    b2 = b2_ref[...].astype(act_dt)        # [H, 1]
    b3 = b3_ref[...]                       # [n_act, 1] f32 (final epilogue stays f32)

    def slab_body(s, carry):
        # x slab in its HBM layout: [slab, obs] f32 -> bf16 for the MXU.
        xb = x_ref[s].astype(jnp.bfloat16)
        # Layer 1, feature-major via NT contraction over obs:
        #   [H, slab] = w1[H, obs] . xb[slab, obs]^T   (f32 accumulate on MXU)
        a1 = lax.dot_general(w1, xb, (((1,), (1,)), ((), ())),
                             preferred_element_type=jnp.float32)
        h1 = jnp.maximum(a1.astype(act_dt) + b1, 0.0).astype(jnp.bfloat16)
        # Layer 2: [H, slab] = [H, H] @ [H, slab]
        a2 = jnp.dot(w2, h1, preferred_element_type=jnp.float32)
        h2 = jnp.maximum(a2.astype(act_dt) + b2, 0.0).astype(jnp.bfloat16)
        # Layer 3 (Q-values, no activation): [n_act, slab]
        a3 = jnp.dot(w3, h2, preferred_element_type=jnp.float32)
        o_ref[s] = (a3 + b3).astype(o_ref.dtype)
        return carry

    # Fully unrolled: short, fixed trip count -> LLO scheduler sees everything.
    lax.fori_loop(0, n_slabs, slab_body, 0, unroll=True)


@functools.partial(jax.jit, static_argnames=("batch_tile", "bf16_epilogue"))
def mlp_forward(x, params, *, batch_tile=DEFAULT_BATCH_TILE,
                bf16_epilogue=_BF16_EPILOGUE_DEFAULT):
    """Fused MLP forward.  x: [B, obs] f32 -> [B, n_act] f32 (PyTorch layout)."""
    assert batch_tile % 128 == 0 and batch_tile >= 128
    w1, b1, w2, b2, w3, b3 = params          # w: [out, in] f32, b: [out, 1] f32
    B, obs = x.shape
    H = w1.shape[0]
    n_act = w3.shape[0]

    # ---- Tile sizing -------------------------------------------------------
    # Lane-aligned batch tile; ensure >= 2 grid steps when the batch allows it
    # (so v7x megacore shards batch tiles across both TensorCores).
    b_ceil = _round_up(B, 128)
    if b_ceil >= 2 * 128:
        tb = min(batch_tile, _round_up(pl.cdiv(b_ceil, 2), 128))
    else:
        tb = b_ceil
    slab = _SLAB if tb % _SLAB == 0 else 128     # inner slab width (divides tb)
    n_slabs = tb // slab
    b_pad = _round_up(B, tb)
    grid = (b_pad // tb,)

    # ---- Wrapper-side prep (no x transpose / bf16 round trip any more) -----
    if b_pad != B:
        x = jnp.pad(x, ((0, b_pad - B), (0, 0)))     # zero pad tail batch rows
    x3 = x.reshape(b_pad // slab, slab, obs)         # contiguous -> free reshape
    w1b = w1.astype(jnp.bfloat16)
    w2b = w2.astype(jnp.bfloat16)
    w3b = w3.astype(jnp.bfloat16)

    # ---- VMEM budget & cost hint -------------------------------------------
    x_block_vmem = n_slabs * slab * 128 * 4          # obs lane-padded to 128, f32
    out_block_vmem = n_slabs * 8 * slab * 4          # n_act sublane-padded to 8, f32
    vmem_limit = int(min(48 * 2 ** 20,
                         max(32 * 2 ** 20, 3 * (x_block_vmem + out_block_vmem))))
    flops = 2 * b_pad * (obs * H + H * H + H * n_act)
    bytes_accessed = (b_pad * obs * 4 + b_pad * n_act * 4
                      + (H * obs + H * H + n_act * H) * 2 + (2 * H + n_act) * 4)

    kernel = functools.partial(mlp_kernel, bf16_epilogue=bf16_epilogue)

    out3 = pl.pallas_call(
        kernel,
        out_shape=jax.ShapeDtypeStruct((b_pad // slab, n_act, slab), jnp.float32),
        grid_spec=pltpu.PrefetchScalarGridSpec(
            num_scalar_prefetch=0,
            grid=grid,
            in_specs=[
                # x: n_slabs slabs per grid step, batch-major, pipelined.
                pl.BlockSpec((n_slabs, slab, obs), lambda i: (i, 0, 0)),
                # Weights / biases: constant index maps -> VMEM-resident.
                pl.BlockSpec((H, obs), lambda i: (0, 0)),
                pl.BlockSpec((H, 1), lambda i: (0, 0)),
                pl.BlockSpec((H, H), lambda i: (0, 0)),
                pl.BlockSpec((H, 1), lambda i: (0, 0)),
                pl.BlockSpec((n_act, H), lambda i: (0, 0)),
                pl.BlockSpec((n_act, 1), lambda i: (0, 0)),
            ],
            out_specs=pl.BlockSpec((n_slabs, n_act, slab), lambda i: (i, 0, 0)),
        ),
        compiler_params=pltpu.CompilerParams(
            dimension_semantics=("parallel",),       # megacore sharding on v7x
            vmem_limit_bytes=vmem_limit,
        ),
        cost_estimate=pl.CostEstimate(flops=flops, transcendentals=0,
                                      bytes_accessed=bytes_accessed),
    )(x3, w1b, b1, w2b, b2, w3b, b3)

    # Back to PyTorch layout [B, n_act] (small transpose; the consumer contract
    # requires batch-major output).
    out = jnp.transpose(out3, (0, 2, 1)).reshape(b_pad, n_act)
    return out[:B]


def init_params(key, obs_size, n_act):
    """PyTorch nn.Linear default init: U[-1/sqrt(fan_in), +1/sqrt(fan_in)].

    Weights stored [out, in] (PyTorch layout, feature-major kernel needs no
    transpose); biases [out, 1] columns for lane-broadcast in the kernel.
    """
    ks = jax.random.split(key, 6)

    def linear(kw, kb, fan_in, fan_out):
        bound = 1.0 / (fan_in ** 0.5)
        w = jax.random.uniform(kw, (fan_out, fan_in), jnp.float32, -bound, bound)
        b = jax.random.uniform(kb, (fan_out, 1), jnp.float32, -bound, bound)
        return w, b

    w1, b1 = linear(ks[0], ks[1], obs_size, HIDDEN)
    w2, b2 = linear(ks[2], ks[3], HIDDEN, HIDDEN)
    w3, b3 = linear(ks[4], ks[5], HIDDEN, n_act)
    return (w1, b1, w2, b2, w3, b3)


def reference_forward(x, params, *, mxu_dtype=jnp.float32, bf16_epilogue=False):
    """Pure-JAX reference.  Defaults (f32, f32 epilogue) == PyTorch MLP.forward;
    mxu_dtype=bfloat16 with the kernel's bf16_epilogue flag mirrors the kernel's
    quantization for tight comparisons."""
    w1, b1, w2, b2, w3, b3 = params

    def mm(h, w):
        return jnp.dot(h.astype(mxu_dtype), w.T.astype(mxu_dtype),
                       preferred_element_type=jnp.float32)

    def hidden(acc, b):
        if bf16_epilogue:
            return jnp.maximum(acc.astype(jnp.bfloat16)
                               + b[:, 0].astype(jnp.bfloat16),
                               0.0).astype(jnp.float32)
        return jnp.maximum(acc + b[:, 0], 0.0)

    h1 = hidden(mm(x, w1), b1)
    h2 = hidden(mm(h1, w2), b2)
    return mm(h2, w3) + b3[:, 0]


if __name__ == "__main__":
    obs_size, n_act = 4, 2                      # CartPole-style DQN sizes
    key = jax.random.PRNGKey(0)
    kx, kp, kx2 = jax.random.split(key, 3)
    params = init_params(kp, obs_size, n_act)

    # Small demo batch: single tile, padded-batch path.
    x = jax.random.normal(kx, (8, obs_size), jnp.float32)
    out = jax.block_until_ready(mlp_forward(x, params))
    assert out.shape == (8, n_act), out.shape
    ref_q = reference_forward(x, params, mxu_dtype=jnp.bfloat16,
                              bf16_epilogue=_BF16_EPILOGUE_DEFAULT)
    ref_f32 = reference_forward(x, params)
    assert jnp.allclose(out, ref_q, atol=2e-3, rtol=2e-3), "mismatch vs quantized ref"
    assert jnp.allclose(out, ref_f32, atol=5e-2, rtol=5e-2), "mismatch vs f32 ref"

    # Larger (non-divisible) batch: multi-step grid + inner slab loop + tail pad.
    x2 = jax.random.normal(kx2, (1000, obs_size), jnp.float32)
    out2 = jax.block_until_ready(mlp_forward(x2, params))
    ref2 = reference_forward(x2, params, mxu_dtype=jnp.bfloat16,
                             bf16_epilogue=_BF16_EPILOGUE_DEFAULT)
    assert out2.shape == (1000, n_act), out2.shape
    assert jnp.allclose(out2, ref2, atol=2e-3, rtol=2e-3), "mismatch on tiled path"

    print("KERNEL_OK")
</pallas_src>

<mosaic_0001>
module attributes {stable_mosaic.version = 11 : i64} {
  func.func @mlp_kernel(%arg0: i32, %arg1: memref<1x128x4xf32, #tpu.memory_space<vmem>>, %arg2: memref<50x4xbf16, #tpu.memory_space<vmem>>, %arg3: memref<50x1xf32, #tpu.memory_space<vmem>>, %arg4: memref<50x50xbf16, #tpu.memory_space<vmem>>, %arg5: memref<50x1xf32, #tpu.memory_space<vmem>>, %arg6: memref<2x50xbf16, #tpu.memory_space<vmem>>, %arg7: memref<2x1xf32, #tpu.memory_space<vmem>>, %arg8: memref<1x2x128xf32, #tpu.memory_space<vmem>>) attributes {dimension_semantics = [#tpu.dimension_semantics<parallel>], iteration_bounds = array<i64: 1>, scalar_prefetch = 0 : i64, scratch_operands = 0 : i64, tpu.core_type = #tpu.core_type<tc>, window_params = [{transform_indices = @transform_0, window_bounds = array<i64: 1, 128, 4>}, {pipeline_mode = #tpu.pipeline_mode<synchronous>, transform_indices = @transform_1, window_bounds = array<i64: 50, 4>}, {pipeline_mode = #tpu.pipeline_mode<synchronous>, transform_indices = @transform_2, window_bounds = array<i64: 50, 1>}, {pipeline_mode = #tpu.pipeline_mode<synchronous>, transform_indices = @transform_3, window_bounds = array<i64: 50, 50>}, {pipeline_mode = #tpu.pipeline_mode<synchronous>, transform_indices = @transform_4, window_bounds = array<i64: 50, 1>}, {pipeline_mode = #tpu.pipeline_mode<synchronous>, transform_indices = @transform_5, window_bounds = array<i64: 2, 50>}, {pipeline_mode = #tpu.pipeline_mode<synchronous>, transform_indices = @transform_6, window_bounds = array<i64: 2, 1>}, {transform_indices = @transform_7, window_bounds = array<i64: 1, 2, 128>}]} {
    %c0 = arith.constant 0 : index
    %c0_0 = arith.constant 0 : index
    %0 = vector.load %arg2[%c0, %c0_0] : memref<50x4xbf16, #tpu.memory_space<vmem>>, vector<50x4xbf16>
    %c0_1 = arith.constant 0 : index
    %c0_2 = arith.constant 0 : index
    %1 = vector.load %arg4[%c0_1, %c0_2] : memref<50x50xbf16, #tpu.memory_space<vmem>>, vector<50x50xbf16>
    %c0_3 = arith.constant 0 : index
    %c0_4 = arith.constant 0 : index
    %2 = vector.load %arg6[%c0_3, %c0_4] : memref<2x50xbf16, #tpu.memory_space<vmem>>, vector<2x50xbf16>
    %c0_5 = arith.constant 0 : index
    %c0_6 = arith.constant 0 : index
    %3 = vector.load %arg3[%c0_5, %c0_6] : memref<50x1xf32, #tpu.memory_space<vmem>>, vector<50x1xf32>
    %c0_7 = arith.constant 0 : index
    %c0_8 = arith.constant 0 : index
    %4 = vector.load %arg5[%c0_7, %c0_8] : memref<50x1xf32, #tpu.memory_space<vmem>>, vector<50x1xf32>
    %c0_9 = arith.constant 0 : index
    %c0_10 = arith.constant 0 : index
    %5 = vector.load %arg7[%c0_9, %c0_10] : memref<2x1xf32, #tpu.memory_space<vmem>>, vector<2x1xf32>
    %c0_i32 = arith.constant 0 : i32
    %6 = arith.index_cast %c0_i32 : i32 to index
    %c0_11 = arith.constant 0 : index
    %c0_12 = arith.constant 0 : index
    %7 = vector.load %arg1[%6, %c0_11, %c0_12] : memref<1x128x4xf32, #tpu.memory_space<vmem>>, vector<1x128x4xf32>
    %8 = vector.shape_cast %7 : vector<1x128x4xf32> to vector<128x4xf32>
    %9 = arith.truncf %8 : vector<128x4xf32> to vector<128x4xbf16>
    %cst = arith.constant dense<0.000000e+00> : vector<50x128xf32>
    %10 = tpu.matmul %0, %9, %cst {dimension_numbers = #tpu.dot_dimension_numbers<[1], [1], [0], [0], [0, 0, 1, 0], [], []>} : vector<50x4xbf16>, vector<128x4xbf16>, vector<50x128xf32> -> vector<50x128xf32>
    %11 = vector.broadcast %3 : vector<50x1xf32> to vector<50x128xf32>
    %12 = arith.addf %10, %11 : vector<50x128xf32>
    %cst_13 = arith.constant 0.000000e+00 : f32
    %13 = vector.broadcast %cst_13 : f32 to vector<50x128xf32>
    %14 = arith.maximumf %12, %13 : vector<50x128xf32>
    %15 = arith.truncf %14 : vector<50x128xf32> to vector<50x128xbf16>
    %cst_14 = arith.constant dense<0.000000e+00> : vector<50x128xf32>
    %16 = tpu.matmul %1, %15, %cst_14 {dimension_numbers = #tpu.dot_dimension_numbers<[1], [0], [0], [1], [0, 0, 1, 1], [], []>} : vector<50x50xbf16>, vector<50x128xbf16>, vector<50x128xf32> -> vector<50x128xf32>
    %17 = vector.broadcast %4 : vector<50x1xf32> to vector<50x128xf32>
    %18 = arith.addf %16, %17 : vector<50x128xf32>
    %cst_15 = arith.constant 0.000000e+00 : f32
    %19 = vector.broadcast %cst_15 : f32 to vector<50x128xf32>
    %20 = arith.maximumf %18, %19 : vector<50x128xf32>
    %21 = arith.truncf %20 : vector<50x128xf32> to vector<50x128xbf16>
    %cst_16 = arith.constant dense<0.000000e+00> : vector<2x128xf32>
    %22 = tpu.matmul %2, %21, %cst_16 {dimension_numbers = #tpu.dot_dimension_numbers<[1], [0], [0], [1], [0, 0, 1, 1], [], []>} : vector<2x50xbf16>, vector<50x128xbf16>, vector<2x128xf32> -> vector<2x128xf32>
    %23 = vector.broadcast %5 : vector<2x1xf32> to vector<2x128xf32>
    %24 = arith.addf %22, %23 : vector<2x128xf32>
    %25 = arith.index_cast %c0_i32 : i32 to index
    %c0_17 = arith.constant 0 : index
    %c0_18 = arith.constant 0 : index
    %26 = vector.load %arg8[%25, %c0_17, %c0_18] : memref<1x2x128xf32, #tpu.memory_space<vmem>>, vector<1x2x128xf32>
    %27 = vector.shape_cast %26 : vector<1x2x128xf32> to vector<2x128xf32>
    %28 = vector.shape_cast %24 : vector<2x128xf32> to vector<1x2x128xf32>
    tpu.vector_store %arg8[%25, %c0_17, %c0_18], %28 {strides = array<i32>} : memref<1x2x128xf32, #tpu.memory_space<vmem>>, vector<1x2x128xf32>,
    %c1_i32 = arith.constant 1 : i32
    return
  }
  func.func @transform_0(%arg0: i32) -> (i32, i32, i32) {
    %c0_i32 = arith.constant 0 : i32
    %c0_i32_0 = arith.constant 0 : i32
    %c0_i32_1 = arith.constant 0 : i32
    return %arg0, %c0_i32, %c0_i32_0 : i32, i32, i32
  }
  func.func @transform_1(%arg0: i32) -> (i32, i32) {
    %c0_i32 = arith.constant 0 : i32
    %c0_i32_0 = arith.constant 0 : i32
    %c0_i32_1 = arith.constant 0 : i32
    return %c0_i32, %c0_i32_0 : i32, i32
  }
  func.func @transform_2(%arg0: i32) -> (i32, i32) {
    %c0_i32 = arith.constant 0 : i32
    %c0_i32_0 = arith.constant 0 : i32
    %c0_i32_1 = arith.constant 0 : i32
    return %c0_i32, %c0_i32_0 : i32, i32
  }
  func.func @transform_3(%arg0: i32) -> (i32, i32) {
    %c0_i32 = arith.constant 0 : i32
    %c0_i32_0 = arith.constant 0 : i32
    %c0_i32_1 = arith.constant 0 : i32
    return %c0_i32, %c0_i32_0 : i32, i32
  }
  func.func @transform_4(%arg0: i32) -> (i32, i32) {
    %c0_i32 = arith.constant 0 : i32
    %c0_i32_0 = arith.constant 0 : i32
    %c0_i32_1 = arith.constant 0 : i32
    return %c0_i32, %c0_i32_0 : i32, i32
  }
  func.func @transform_5(%arg0: i32) -> (i32, i32) {
    %c0_i32 = arith.constant 0 : i32
    %c0_i32_0 = arith.constant 0 : i32
    %c0_i32_1 = arith.constant 0 : i32
    return %c0_i32, %c0_i32_0 : i32, i32
  }
  func.func @transform_6(%arg0: i32) -> (i32, i32) {
    %c0_i32 = arith.constant 0 : i32
    %c0_i32_0 = arith.constant 0 : i32
    %c0_i32_1 = arith.constant 0 : i32
    return %c0_i32, %c0_i32_0 : i32, i32
  }
  func.func @transform_7(%arg0: i32) -> (i32, i32, i32) {
    %c0_i32 = arith.constant 0 : i32
    %c0_i32_0 = arith.constant 0 : i32
    %c0_i32_1 = arith.constant 0 : i32
    return %arg0, %c0_i32, %c0_i32_0 : i32, i32, i32
  }
}

</mosaic_0001>

<llo_original>
// kernel: mlp_forward.1
$region0: #{mlp_forward.1}
  #allocation0 [shape = 'u32[]', space=smem, size = 0x4, offset = 0x4, fixed_abs, tag = 'smem constant byte address 0x4 - core index']
  #allocation1 [shape = 'u32[144,128]{1,0:T(1,128)}', space=vmem, size = 0x12000, scoped, tag = 'internal scratch']
  %s0 = inlined_call_operand.vmem [shape: f32[1,128,4], index: 0, kind: input, shape index: {}]
  %s1 = inlined_call_operand.vmem [shape: bf16[50,4], index: 1, kind: input, shape index: {}]
  %s2 = inlined_call_operand.vmem [shape: f32[50,1], index: 2, kind: input, shape index: {}]
  %s3 = inlined_call_operand.vmem [shape: bf16[50,50], index: 3, kind: input, shape index: {}]
  %s4 = inlined_call_operand.vmem [shape: f32[50,1], index: 4, kind: input, shape index: {}]
  %s5 = inlined_call_operand.vmem [shape: bf16[2,50], index: 5, kind: input, shape index: {}]
  %s6 = inlined_call_operand.vmem [shape: f32[2,1], index: 6, kind: input, shape index: {}]
  %s7 = inlined_call_operand.vmem [shape: f32[1,2,128], index: 7, kind: output, shape index: {}]
  %s8 = sld [smem:[#allocation0]]
  $region38: #{mlp_forward.1} parent=0
    _
  %s10 = ssub.s32 1, %s8
  %s11 = scalar_select 0, %s10, %s8
  // Predicated region
  $region2: #{mlp_forward.1} parent=0 // pred_check
    _
  $region3: #{mlp_forward.1} parent=0 // pred_check_branch
    %13 = sbr.rel (0) target = $region5
  $region4: #{mlp_forward.1} parent=0 // pred_region
    _
  $region5: #{mlp_forward.1} parent=0 // pred_fallthru
    _
  // Predicated region
  $region6: #{mlp_forward.1} parent=0 // pred_check
    _
  $region7: #{mlp_forward.1} parent=0 // pred_check_branch
    %15 = sbr.rel (0) target = $region9
  $region8: #{mlp_forward.1} parent=0 // pred_region
    _
  $region9: #{mlp_forward.1} parent=0 // pred_fallthru
    _
  // Predicated region
  $region10: #{mlp_forward.1} parent=0 // pred_check
    _
  $region11: #{mlp_forward.1} parent=0 // pred_check_branch
    %17 = sbr.rel (0) target = $region13
  $region12: #{mlp_forward.1} parent=0 // pred_region
    _
  $region13: #{mlp_forward.1} parent=0 // pred_fallthru
    _
  // Predicated region
  $region14: #{mlp_forward.1} parent=0 // pred_check
    _
  $region15: #{mlp_forward.1} parent=0 // pred_check_branch
    %19 = sbr.rel (0) target = $region17
  $region16: #{mlp_forward.1} parent=0 // pred_region
    _
  $region17: #{mlp_forward.1} parent=0 // pred_fallthru
    _
  // Predicated region
  $region18: #{mlp_forward.1} parent=0 // pred_check
    _
  $region19: #{mlp_forward.1} parent=0 // pred_check_branch
    %21 = sbr.rel (0) target = $region21
  $region20: #{mlp_forward.1} parent=0 // pred_region
    _
  $region21: #{mlp_forward.1} parent=0 // pred_fallthru
    _
  // Predicated region
  $region22: #{mlp_forward.1} parent=0 // pred_check
    _
  $region23: #{mlp_forward.1} parent=0 // pred_check_branch
    %23 = sbr.rel (0) target = $region25
  $region24: #{mlp_forward.1} parent=0 // pred_region
    _
  $region25: #{mlp_forward.1} parent=0 // pred_fallthru
    _
  // Predicated region
  $region26: #{mlp_forward.1} parent=0 // pred_check
    _
  $region27: #{mlp_forward.1} parent=0 // pred_check_branch
    %25 = sbr.rel (0) target = $region29
  $region28: #{mlp_forward.1} parent=0 // pred_region
    _
  $region29: #{mlp_forward.1} parent=0 // pred_fallthru
    _
  %v27 = vld [vmem:[%s1] sm:$0xf]
  %v28 = vld [vmem:[%s1 + $0x4] sm:$0xf]
  %v29 = vld [vmem:[%s1 + $0x8] sm:$0xf]
  %v30 = vld [vmem:[%s1 + $0xc] sm:$0xf]
  %v31 = vld [vmem:[%s1 + $0x10] sm:$0xf]
  %v32 = vld [vmem:[%s1 + $0x14] sm:$0xf]
  %v33 = vld [vmem:[%s1 + $0x18] sm:$0x1]
  %v34 = vld [vmem:[%s3] sm:$0xf]
  %v35 = vld [vmem:[%s3 + $0x4] sm:$0xf]
  %v36 = vld [vmem:[%s3 + $0x8] sm:$0xf]
  %v37 = vld [vmem:[%s3 + $0xc] sm:$0xf]
  %v38 = vld [vmem:[%s3 + $0x10] sm:$0xf]
  %v39 = vld [vmem:[%s3 + $0x14] sm:$0xf]
  %v40 = vld [vmem:[%s3 + $0x18] sm:$0x1]
  %v41 = vld [vmem:[%s5] sm:$0x1]
  %v42 = vld [vmem:[%s2] sm:$0xff]
  %v43 = vld [vmem:[%s2 + $0x8] sm:$0xff]
  %v44 = vld [vmem:[%s2 + $0x10] sm:$0xff]
  %v45 = vld [vmem:[%s2 + $0x18] sm:$0xff]
  %v46 = vld [vmem:[%s2 + $0x20] sm:$0xff]
  %v47 = vld [vmem:[%s2 + $0x28] sm:$0xff]
  %v48 = vld [vmem:[%s2 + $0x30] sm:$0x3]
  %v49 = vld [vmem:[%s4] sm:$0xff]
  %v50 = vld [vmem:[%s4 + $0x8] sm:$0xff]
  %v51 = vld [vmem:[%s4 + $0x10] sm:$0xff]
  %v52 = vld [vmem:[%s4 + $0x18] sm:$0xff]
  %v53 = vld [vmem:[%s4 + $0x20] sm:$0xff]
  %v54 = vld [vmem:[%s4 + $0x28] sm:$0xff]
  %v55 = vld [vmem:[%s4 + $0x30] sm:$0x3]
  %v56 = vld [vmem:[%s6] sm:$0x3]
  %v57 = vld [vmem:[%s0] sm:$0xff]
  %v58 = vld [vmem:[%s0 + $0x8] sm:$0xff]
  %v59 = vld [vmem:[%s0 + $0x10] sm:$0xff]
  %v60 = vld [vmem:[%s0 + $0x18] sm:$0xff]
  %v61 = vld [vmem:[%s0 + $0x20] sm:$0xff]
  %v62 = vld [vmem:[%s0 + $0x28] sm:$0xff]
  %v63 = vld [vmem:[%s0 + $0x30] sm:$0xff]
  %v64 = vld [vmem:[%s0 + $0x38] sm:$0xff]
  %v65 = vld [vmem:[%s0 + $0x40] sm:$0xff]
  %v66 = vld [vmem:[%s0 + $0x48] sm:$0xff]
  %v67 = vld [vmem:[%s0 + $0x50] sm:$0xff]
  %v68 = vld [vmem:[%s0 + $0x58] sm:$0xff]
  %v69 = vld [vmem:[%s0 + $0x60] sm:$0xff]
  %v70 = vld [vmem:[%s0 + $0x68] sm:$0xff]
  %v71 = vld [vmem:[%s0 + $0x70] sm:$0xff]
  %v72 = vld [vmem:[%s0 + $0x78] sm:$0xff]
  %v73 = vpack.c.bf16 %v58, %v57
  %v74 = vpack.c.bf16 %v60, %v59
  %v75 = vpack.c.bf16 %v62, %v61
  %v76 = vpack.c.bf16 %v64, %v63
  %v77 = vpack.c.bf16 %v66, %v65
  %v78 = vpack.c.bf16 %v68, %v67
  %v79 = vpack.c.bf16 %v70, %v69
  %v80 = vpack.c.bf16 %v72, %v71
  %82 = vset.pattern.permute.xlu0 0
  %83 = vperm.xlu0 %82, %v42
  %v84 = vpop.permute.xlu0 %83
  %87 = vset.pattern.permute.xlu0 0
  %88 = vperm.xlu0 %87, %v43
  %v89 = vpop.permute.xlu0 %88
  %92 = vset.pattern.permute.xlu0 0
  %93 = vperm.xlu0 %92, %v44
  %v94 = vpop.permute.xlu0 %93
  %97 = vset.pattern.permute.xlu0 0
  %98 = vperm.xlu0 %97, %v45
  %v99 = vpop.permute.xlu0 %98
  %102 = vset.pattern.permute.xlu0 0
  %103 = vperm.xlu0 %102, %v46
  %v104 = vpop.permute.xlu0 %103
  %107 = vset.pattern.permute.xlu0 0
  %108 = vperm.xlu0 %107, %v47
  %v109 = vpop.permute.xlu0 %108
  %112 = vset.pattern.permute.xlu0 0
  %113 = vperm.xlu0 %112, %v48
  %v114 = vpop.permute.xlu0 %113
  %v123 = vunpack.c.l.b16 %v27
  %v124 = vunpack.c.l.b16 %v28
  %v125 = vunpack.c.l.b16 %v29
  %v126 = vunpack.c.l.b16 %v30
  %v127 = vunpack.c.l.b16 %v31
  %v128 = vunpack.c.l.b16 %v32
  %v129 = vunpack.c.l.b16 %v33
  %v130 = vpack.c.b16 %v124, %v123
  %v131 = vpack.c.b16 %v126, %v125
  %v132 = vpack.c.b16 %v128, %v127
  %v133 = vpack.c.b16 %v129, %v129
  %vm134 = vcmask 31744
  %v136 = vsel %vm134, %v130, 0
  %v139 = vsel %vm134, %v131, 0
  %v142 = vsel %vm134, %v132, 0
  %v145 = vsel %vm134, %v133, 0
  %v148 = vsel %vm134, %v73, 0
  %v151 = vsel %vm134, %v74, 0
  %v154 = vsel %vm134, %v75, 0
  %v157 = vsel %vm134, %v76, 0
  %v160 = vsel %vm134, %v77, 0
  %v163 = vsel %vm134, %v78, 0
  %v166 = vsel %vm134, %v79, 0
  %v169 = vsel %vm134, %v80, 0
  %171 = vmatprep.subr.bf16.mxu0 0
  %172 = vmatpush1.bf16.xpose.msra.mxu0 %v148
  %173 = vmatprep.subr.bf16.mxu0 0
  %174 = vmatpush1.bf16.xpose.msra.mxu0 %v151
  %175 = vmatprep.subr.bf16.mxu0 0
  %176 = vmatpush1.bf16.xpose.msra.mxu0 %v154
  %177 = vmatprep.subr.bf16.mxu0 0
  %178 = vmatpush1.bf16.xpose.msra.mxu0 %v157
  %179 = vmatprep.subr.bf16.mxu0 0
  %180 = vmatpush1.bf16.xpose.msra.mxu0 %v160
  %181 = vmatprep.subr.bf16.mxu0 0
  %182 = vmatpush1.bf16.xpose.msra.mxu0 %v163
  %183 = vmatprep.subr.bf16.mxu0 0
  %184 = vmatpush1.bf16.xpose.msra.mxu0 %v166
  %185 = vmatprep.subr.bf16.mxu0 0
  %186 = vmatpush1.bf16.xpose.msra.mxu0 %v169
  %187 = vmatprep.subr.bf16.mxu0 0
  %188 = vmatpush1.bf16.xpose.msra.mxu0 0
  %189 = vmatprep.subr.bf16.mxu0 0
  %190 = vmatpush1.bf16.xpose.msra.mxu0 0
  %191 = vmatprep.subr.bf16.mxu0 0
  %192 = vmatpush1.bf16.xpose.msra.mxu0 0
  %193 = vmatprep.subr.bf16.mxu0 0
  %194 = vmatpush1.bf16.xpose.msra.mxu0 0
  %195 = vmatprep.subr.bf16.mxu0 0
  %196 = vmatpush1.bf16.xpose.msra.mxu0 0
  %197 = vmatprep.subr.bf16.mxu0 0
  %198 = vmatpush1.bf16.xpose.msra.mxu0 0
  %199 = vmatprep.subr.bf16.mxu0 0
  %200 = vmatpush1.bf16.xpose.msra.mxu0 0
  %201 = vmatprep.subr.bf16.mxu0 0
  %202 = vmatpush1.bf16.xpose.msra.mxu0 0
  %203 = vmatprep.mubr.bf16.mxu0 0
  %204 = vmatmul.mubr.bf16.gmra.mrb[0].mxu0 %v136
  %v205 = vpop.f32.mrb[0].mxu0
  %v206 = vadd.f32 %v84, %v205
  %v207 = vpop.f32.mrb[0].mxu0
  %v208 = vpop.f32.mrb[0].mxu0
  %v209 = vadd.f32 %v89, %v208
  %v210 = vpop.f32.mrb[0].mxu0
  %211 = vmatprep.mubr.bf16.mxu0 0
  %212 = vmatmul.mubr.bf16.gmra.mrb[0].mxu0 %v139
  %v213 = vpop.f32.mrb[0].mxu0
  %v214 = vadd.f32 %v94, %v213
  %v215 = vpop.f32.mrb[0].mxu0
  %v216 = vpop.f32.mrb[0].mxu0
  %v217 = vadd.f32 %v99, %v216
  %v218 = vpop.f32.mrb[0].mxu0
  %219 = vmatprep.mubr.bf16.mxu0 0
  %220 = vmatmul.mubr.bf16.gmra.mrb[0].mxu0 %v142
  %v221 = vpop.f32.mrb[0].mxu0
  %v222 = vadd.f32 %v104, %v221
  %v223 = vpop.f32.mrb[0].mxu0
  %v224 = vpop.f32.mrb[0].mxu0
  %v225 = vadd.f32 %v109, %v224
  %v226 = vpop.f32.mrb[0].mxu0
  %227 = vmatprep.mubr.bf16.mxu0 0
  %228 = vmatmul.mubr.bf16.gmra.mrb[0].mxu0 %v145
  %v229 = vpop.f32.mrb[0].mxu0
  %v230 = vadd.f32 %v114, %v229
  %v231 = vpop.f32.mrb[0].mxu0
  %v232 = vpop.f32.mrb[0].mxu0
  %v233 = vpop.f32.mrb[0].mxu0
  %234 = vdwg.mxu0
  %v235 = vmax.f32 %v206, 0.0
  %v236 = vmax.f32 %v209, 0.0
  %v237 = vmax.f32 %v214, 0.0
  %v238 = vmax.f32 %v217, 0.0
  %v239 = vmax.f32 %v222, 0.0
  %v240 = vmax.f32 %v225, 0.0
  %v241 = vmax.f32 %v230, 0.0
  %v242 = vpack.c.bf16 %v236, %v235
  %v243 = vpack.c.bf16 %v238, %v237
  %v244 = vpack.c.bf16 %v240, %v239
  %v245 = vpack.c.bf16 %v241, %v241
  %247 = vset.pattern.permute.xlu0 0
  %248 = vperm.xlu0 %247, %v49
  %v249 = vpop.permute.xlu0 %248
  %252 = vset.pattern.permute.xlu0 0
  %253 = vperm.xlu0 %252, %v50
  %v254 = vpop.permute.xlu0 %253
  %257 = vset.pattern.permute.xlu0 0
  %258 = vperm.xlu0 %257, %v51
  %v259 = vpop.permute.xlu0 %258
  %262 = vset.pattern.permute.xlu0 0
  %263 = vperm.xlu0 %262, %v52
  %v264 = vpop.permute.xlu0 %263
  %267 = vset.pattern.permute.xlu0 0
  %268 = vperm.xlu0 %267, %v53
  %v269 = vpop.permute.xlu0 %268
  %272 = vset.pattern.permute.xlu0 0
  %273 = vperm.xlu0 %272, %v54
  %v274 = vpop.permute.xlu0 %273
  %277 = vset.pattern.permute.xlu0 0
  %278 = vperm.xlu0 %277, %v55
  %v279 = vpop.permute.xlu0 %278
  %v288 = vunpack.c.l.b16 %v34
  %v289 = vunpack.c.l.b16 %v35
  %v290 = vunpack.c.l.b16 %v36
  %v291 = vunpack.c.l.b16 %v37
  %v292 = vunpack.c.l.b16 %v38
  %v293 = vunpack.c.l.b16 %v39
  %v294 = vunpack.c.l.b16 %v40
  %v295 = vpack.c.b16 %v289, %v288
  %v296 = vpack.c.b16 %v291, %v290
  %v297 = vpack.c.b16 %v293, %v292
  %v298 = vpack.c.b16 %v294, %v294
  %vm299 = vcmask 408576
  %v301 = vsel %vm299, %v295, 0
  %v304 = vsel %vm299, %v296, 0
  %v307 = vsel %vm299, %v297, 0
  %v310 = vsel %vm299, %v298, 0
  %vm312 = vcmask 1040384
  %v314 = vsel %vm312, %v245, 0
  %316 = vmatprep.subr.bf16.mxu0 0
  %317 = vmatpush1.bf16.msra.mxu0 %v242
  %318 = vmatprep.subr.bf16.mxu0 0
  %319 = vmatpush1.bf16.msra.mxu0 %v243
  %320 = vmatprep.subr.bf16.mxu0 0
  %321 = vmatpush1.bf16.msra.mxu0 %v244
  %322 = vmatprep.subr.bf16.mxu0 0
  %323 = vmatpush1.bf16.msra.mxu0 %v314
  %324 = vmatprep.subr.bf16.mxu0 0
  %325 = vmatpush1.bf16.msra.mxu0 0
  %326 = vmatprep.subr.bf16.mxu0 0
  %327 = vmatpush1.bf16.msra.mxu0 0
  %328 = vmatprep.subr.bf16.mxu0 0
  %329 = vmatpush1.bf16.msra.mxu0 0
  %330 = vmatprep.subr.bf16.mxu0 0
  %331 = vmatpush1.bf16.msra.mxu0 0
  %332 = vmatprep.subr.bf16.mxu0 0
  %333 = vmatpush1.bf16.msra.mxu0 0
  %334 = vmatprep.subr.bf16.mxu0 0
  %335 = vmatpush1.bf16.msra.mxu0 0
  %336 = vmatprep.subr.bf16.mxu0 0
  %337 = vmatpush1.bf16.msra.mxu0 0
  %338 = vmatprep.subr.bf16.mxu0 0
  %339 = vmatpush1.bf16.msra.mxu0 0
  %340 = vmatprep.subr.bf16.mxu0 0
  %341 = vmatpush1.bf16.msra.mxu0 0
  %342 = vmatprep.subr.bf16.mxu0 0
  %343 = vmatpush1.bf16.msra.mxu0 0
  %344 = vmatprep.subr.bf16.mxu0 0
  %345 = vmatpush1.bf16.msra.mxu0 0
  %346 = vmatprep.subr.bf16.mxu0 0
  %347 = vmatpush1.bf16.msra.mxu0 0
  %348 = vmatprep.mubr.bf16.mxu0 0
  %349 = vmatmul.mubr.bf16.gmra.mrb[0].mxu0 %v301
  %v350 = vpop.f32.mrb[0].mxu0
  %v351 = vadd.f32 %v249, %v350
  %v352 = vpop.f32.mrb[0].mxu0
  %v353 = vpop.f32.mrb[0].mxu0
  %v354 = vadd.f32 %v254, %v353
  %v355 = vpop.f32.mrb[0].mxu0
  %356 = vmatprep.mubr.bf16.mxu0 0
  %357 = vmatmul.mubr.bf16.gmra.mrb[0].mxu0 %v304
  %v358 = vpop.f32.mrb[0].mxu0
  %v359 = vadd.f32 %v259, %v358
  %v360 = vpop.f32.mrb[0].mxu0
  %v361 = vpop.f32.mrb[0].mxu0
  %v362 = vadd.f32 %v264, %v361
  %v363 = vpop.f32.mrb[0].mxu0
  %364 = vmatprep.mubr.bf16.mxu0 0
  %365 = vmatmul.mubr.bf16.gmra.mrb[0].mxu0 %v307
  %v366 = vpop.f32.mrb[0].mxu0
  %v367 = vadd.f32 %v269, %v366
  %v368 = vpop.f32.mrb[0].mxu0
  %v369 = vpop.f32.mrb[0].mxu0
  %v370 = vadd.f32 %v274, %v369
  %v371 = vpop.f32.mrb[0].mxu0
  %372 = vmatprep.mubr.bf16.mxu0 0
  %373 = vmatmul.mubr.bf16.gmra.mrb[0].mxu0 %v310
  %v374 = vpop.f32.mrb[0].mxu0
  %v375 = vadd.f32 %v279, %v374
  %v376 = vpop.f32.mrb[0].mxu0
  %v377 = vpop.f32.mrb[0].mxu0
  %v378 = vpop.f32.mrb[0].mxu0
  %379 = vdwg.mxu0
  %v380 = vmax.f32 %v351, 0.0
  %v381 = vmax.f32 %v354, 0.0
  %v382 = vmax.f32 %v359, 0.0
  %v383 = vmax.f32 %v362, 0.0
  %v384 = vmax.f32 %v367, 0.0
  %v385 = vmax.f32 %v370, 0.0
  %v386 = vmax.f32 %v375, 0.0
  %v387 = vpack.c.bf16 %v381, %v380
  %v388 = vpack.c.bf16 %v383, %v382
  %v389 = vpack.c.bf16 %v385, %v384
  %v390 = vpack.c.bf16 %v386, %v386
  %392 = vset.pattern.permute.xlu0 0
  %393 = vperm.xlu0 %392, %v56
  %v394 = vpop.permute.xlu0 %393
  %v397 = vsel %vm299, %v41, 0
  %v400 = vsel %vm312, %v390, 0
  %402 = vmatprep.subr.bf16.mxu0 0
  %403 = vmatpush1.bf16.msra.mxu0 %v387
  %404 = vmatprep.subr.bf16.mxu0 0
  %405 = vmatpush1.bf16.msra.mxu0 %v388
  %406 = vmatprep.subr.bf16.mxu0 0
  %407 = vmatpush1.bf16.msra.mxu0 %v389
  %408 = vmatprep.subr.bf16.mxu0 0
  %409 = vmatpush1.bf16.msra.mxu0 %v400
  %410 = vmatprep.subr.bf16.mxu0 0
  %411 = vmatpush1.bf16.msra.mxu0 0
  %412 = vmatprep.subr.bf16.mxu0 0
  %413 = vmatpush1.bf16.msra.mxu0 0
  %414 = vmatprep.subr.bf16.mxu0 0
  %415 = vmatpush1.bf16.msra.mxu0 0
  %416 = vmatprep.subr.bf16.mxu0 0
  %417 = vmatpush1.bf16.msra.mxu0 0
  %418 = vmatprep.subr.bf16.mxu0 0
  %419 = vmatpush1.bf16.msra.mxu0 0
  %420 = vmatprep.subr.bf16.mxu0 0
  %421 = vmatpush1.bf16.msra.mxu0 0
  %422 = vmatprep.subr.bf16.mxu0 0
  %423 = vmatpush1.bf16.msra.mxu0 0
  %424 = vmatprep.subr.bf16.mxu0 0
  %425 = vmatpush1.bf16.msra.mxu0 0
  %426 = vmatprep.subr.bf16.mxu0 0
  %427 = vmatpush1.bf16.msra.mxu0 0
  %428 = vmatprep.subr.bf16.mxu0 0
  %429 = vmatpush1.bf16.msra.mxu0 0
  %430 = vmatprep.subr.bf16.mxu0 0
  %431 = vmatpush1.bf16.msra.mxu0 0
  %432 = vmatprep.subr.bf16.mxu0 0
  %433 = vmatpush1.bf16.msra.mxu0 0
  %434 = vmatprep.mubr.bf16.mxu0 0
  %435 = vmatmul.mubr.bf16.gmra.mrb[0].mxu0 %v397
  %v436 = vpop.f32.mrb[0].mxu0
  %v437 = vadd.f32 %v394, %v436
  %v438 = vpop.f32.mrb[0].mxu0
  %v439 = vpop.f32.mrb[0].mxu0
  %v440 = vpop.f32.mrb[0].mxu0
  %441 = vdwg.mxu0
  %442 = vst [vmem:[%s7] sm:$0x3] %v437
  // Predicated region
  $region30: #{mlp_forward.1} parent=0 // pred_check
    _
  $region31: #{mlp_forward.1} parent=0 // pred_check_branch
    %444 = sbr.rel (0) target = $region33
  $region32: #{mlp_forward.1} parent=0 // pred_region
    _
  $region33: #{mlp_forward.1} parent=0 // pred_fallthru
    _
  // Predicated region
  $region34: #{mlp_forward.1} parent=0 // pred_check
    _
  $region35: #{mlp_forward.1} parent=0 // pred_check_branch
    %446 = sbr.rel (0) target = $region37
  $region36: #{mlp_forward.1} parent=0 // pred_region
    _
  $region37: #{mlp_forward.1} parent=0 // pred_fallthru
    _

</llo_original>
